<compile_context>
chip_gen: v5e
topology: v5e:2x2
jax: 0.10.0
libtpu: 0.0.40
codegen_flags: <defaults>
</compile_context>

<pallas_src>
import jax
import jax.numpy as jnp
from jax.experimental import pallas as pl
from jax.experimental.pallas import tpu as pltpu


def _attention_kernel(x_ref, w1_ref, b1_ref, w2_ref, b2_ref, o_ref):
    # x_ref : (1, C, T)  one batch element, channel-major, T spatial lanes
    # w1_ref: (Ch, C)    b1_ref: (Ch, 1)
    # w2_ref: (C, Ch)    b2_ref: (C, 1)
    # o_ref : (1, C, T)
    x = x_ref[0]                                                      # native dtype (no tile-wide upcast)
    # 1x1 conv #1 (channel squeeze) + bias + ReLU; f32 accumulation on the MXU.
    h = jnp.dot(w1_ref[...], x, preferred_element_type=jnp.float32)   # (Ch, T)
    h = jnp.maximum(h + b1_ref[...], 0.0)
    # 1x1 conv #2 (channel expand) + bias.
    a = jnp.dot(w2_ref[...], h, preferred_element_type=jnp.float32)   # (C, T)
    a = a + b2_ref[...]
    # Sigmoid as one EUP transcendental: sigmoid(a) == 0.5*(tanh(a/2)+1).
    a = 0.5 * (jnp.tanh(0.5 * a) + 1.0)
    # Gate the input (lane-dense store; T is a multiple of 128 or the full extent).
    o_ref[0] = (x * a.astype(x.dtype)).astype(o_ref.dtype)


def _vmem_budget_bytes():
    """Generation-aware VMEM budget: ~75% of physical capacity, capped at 100 MiB."""
    try:
        cap = int(pltpu.get_tpu_info().vmem_capacity_bytes)
    except Exception:
        cap = 64 * 1024 * 1024  # conservative fallback (v7x per-TensorCore VMEM)
    return min((cap * 3) // 4, 100 * 1024 * 1024)


def _choose_tile(hw, t_cap):
    """Largest lane tile <= t_cap. Prefer a tile that divides hw exactly (no pad,
    no ragged block); otherwise fall back to a lane-dense tile with a ragged,
    masked final block (safe here: every op is element-per-lane)."""
    if hw <= t_cap:
        return hw
    for gran in (512, 256, 128):
        t = (t_cap // gran) * gran
        while t >= gran:
            if hw % t == 0:
                return t
            t -= gran
    return max(128, (t_cap // 256) * 256)


def attention_layer(x_nchw, w1, b1, w2, b2, *, tile_hw=16384):
    """Squeeze-excite attention gate: x * sigmoid(conv1x1(relu(conv1x1(x)))).

    x_nchw: (B, C, H, W)
    w1: (C//8, C)  b1: (C//8,)   -- conv1 1x1 weight/bias
    w2: (C, C//8)  b2: (C,)      -- conv2 1x1 weight/bias
    """
    B, C, H, W = x_nchw.shape
    Ch = w1.shape[0]
    HW = H * W

    # Channel-major, spatial-on-lanes view: a free reshape, no transposes, no pad.
    x3 = x_nchw.reshape(B, C, HW)

    x_itemsize = jnp.dtype(x_nchw.dtype).itemsize
    w_itemsize = jnp.dtype(w1.dtype).itemsize
    weight_bytes = (w1.size + w2.size + b1.size + b2.size) * w_itemsize

    # Largest lane tile that fits the per-generation VMEM budget:
    # double-buffered x in + out blocks plus f32 temporaries, minus resident weights.
    vmem_budget = _vmem_budget_bytes()
    per_lane_bytes = C * (4 * x_itemsize + 12)
    t_cap = max(128, int((vmem_budget - 2 * weight_bytes) // per_lane_bytes))
    t_cap = min(t_cap, tile_hw)
    t = _choose_tile(HW, t_cap)
    n_tiles = pl.cdiv(HW, t)

    # Column biases so they broadcast across the lane (spatial) axis.
    b1_c = b1.reshape(Ch, 1)
    b2_c = b2.reshape(C, 1)

    # Single-buffer the constant weight/bias blocks when they are large enough to
    # matter (reclaims VMEM for bigger x tiles at realistic channel counts).
    w_kwargs = dict(pipeline_mode=pl.Buffered(1)) if weight_bytes >= (1 << 20) else {}

    cost = pl.CostEstimate(
        flops=4 * B * HW * C * Ch,
        transcendentals=B * C * HW,                       # one sigmoid per element
        bytes_accessed=2 * B * C * HW * x_itemsize + weight_bytes,
    )

    out3 = pl.pallas_call(
        _attention_kernel,
        out_shape=jax.ShapeDtypeStruct((B, C, HW), x_nchw.dtype),
        grid_spec=pltpu.PrefetchScalarGridSpec(
            num_scalar_prefetch=0,
            grid=(B, n_tiles),
            in_specs=[
                pl.BlockSpec((1, C, t), lambda b, j: (b, 0, j)),          # x tile
                pl.BlockSpec((Ch, C), lambda b, j: (0, 0), **w_kwargs),   # w1 (resident)
                pl.BlockSpec((Ch, 1), lambda b, j: (0, 0), **w_kwargs),   # b1
                pl.BlockSpec((C, Ch), lambda b, j: (0, 0), **w_kwargs),   # w2 (resident)
                pl.BlockSpec((C, 1), lambda b, j: (0, 0), **w_kwargs),    # b2
            ],
            out_specs=pl.BlockSpec((1, C, t), lambda b, j: (b, 0, j)),
        ),
        compiler_params=pltpu.CompilerParams(
            dimension_semantics=("parallel", "parallel"),
            vmem_limit_bytes=int(vmem_budget),
        ),
        cost_estimate=cost,
    )(x3, w1, b1_c, w2, b2_c)

    return out3.reshape(B, C, H, W)


def reference(x_nchw, w1, b1, w2, b2):
    # Pure-JAX reference of the PyTorch forward (1x1 convs as channel matmuls).
    h = jnp.einsum("bchw,oc->bohw", x_nchw, w1) + b1[None, :, None, None]
    h = jnp.maximum(h, 0.0)
    a = jnp.einsum("bohw,co->bchw", h, w2) + b2[None, :, None, None]
    a = jax.nn.sigmoid(a)
    return x_nchw * a


if __name__ == "__main__":
    key = jax.random.PRNGKey(0)
    B, C, H, W = 2, 32, 16, 16      # H*W = 256 -> single lane-dense block per batch
    Ch = C // 8

    k_x, k_w1, k_b1, k_w2, k_b2 = jax.random.split(key, 5)
    x = jax.random.normal(k_x, (B, C, H, W), dtype=jnp.float32)
    # Deterministic synthetic parameters (same shapes as nn.Conv2d k=1 weights).
    w1 = jax.random.normal(k_w1, (Ch, C), dtype=jnp.float32) * 0.1    # conv1.weight[:, :, 0, 0]
    b1 = jax.random.normal(k_b1, (Ch,), dtype=jnp.float32) * 0.1      # conv1.bias
    w2 = jax.random.normal(k_w2, (C, Ch), dtype=jnp.float32) * 0.1    # conv2.weight[:, :, 0, 0]
    b2 = jax.random.normal(k_b2, (C,), dtype=jnp.float32) * 0.1       # conv2.bias

    out = attention_layer(x, w1, b1, w2, b2)
    out = jax.block_until_ready(out)

    ref = reference(x, w1, b1, w2, b2)
    assert out.shape == (B, C, H, W)
    assert jnp.allclose(out, ref, atol=1e-5, rtol=1e-5), "mismatch vs reference"

    print("KERNEL_OK")
</pallas_src>

<mosaic_0001>
module attributes {stable_mosaic.version = 11 : i64} {
  func.func @_attention_kernel(%arg0: i32, %arg1: i32, %arg2: memref<1x32x256xf32, #tpu.memory_space<vmem>>, %arg3: memref<4x32xf32, #tpu.memory_space<vmem>>, %arg4: memref<4x1xf32, #tpu.memory_space<vmem>>, %arg5: memref<32x4xf32, #tpu.memory_space<vmem>>, %arg6: memref<32x1xf32, #tpu.memory_space<vmem>>, %arg7: memref<1x32x256xf32, #tpu.memory_space<vmem>>) attributes {dimension_semantics = [#tpu.dimension_semantics<parallel>, #tpu.dimension_semantics<parallel>], iteration_bounds = array<i64: 2, 1>, scalar_prefetch = 0 : i64, scratch_operands = 0 : i64, tpu.core_type = #tpu.core_type<tc>, window_params = [{transform_indices = @transform_0, window_bounds = array<i64: 1, 32, 256>}, {pipeline_mode = #tpu.pipeline_mode<synchronous>, transform_indices = @transform_1, window_bounds = array<i64: 4, 32>}, {pipeline_mode = #tpu.pipeline_mode<synchronous>, transform_indices = @transform_2, window_bounds = array<i64: 4, 1>}, {pipeline_mode = #tpu.pipeline_mode<synchronous>, transform_indices = @transform_3, window_bounds = array<i64: 32, 4>}, {pipeline_mode = #tpu.pipeline_mode<synchronous>, transform_indices = @transform_4, window_bounds = array<i64: 32, 1>}, {transform_indices = @transform_5, window_bounds = array<i64: 1, 32, 256>}]} {
    %c0 = arith.constant 0 : index
    %c0_0 = arith.constant 0 : index
    %c0_1 = arith.constant 0 : index
    %0 = vector.load %arg2[%c0, %c0_0, %c0_1] : memref<1x32x256xf32, #tpu.memory_space<vmem>>, vector<1x32x256xf32>
    %1 = vector.shape_cast %0 : vector<1x32x256xf32> to vector<32x256xf32>
    %c0_2 = arith.constant 0 : index
    %c0_3 = arith.constant 0 : index
    %2 = vector.load %arg3[%c0_2, %c0_3] : memref<4x32xf32, #tpu.memory_space<vmem>>, vector<4x32xf32>
    %cst = arith.constant dense<0.000000e+00> : vector<4x256xf32>
    %3 = tpu.matmul %2, %1, %cst {dimension_numbers = #tpu.dot_dimension_numbers<[1], [0], [0], [1], [0, 0, 1, 1], [], []>} : vector<4x32xf32>, vector<32x256xf32>, vector<4x256xf32> -> vector<4x256xf32>
    %c0_4 = arith.constant 0 : index
    %c0_5 = arith.constant 0 : index
    %4 = vector.load %arg4[%c0_4, %c0_5] : memref<4x1xf32, #tpu.memory_space<vmem>>, vector<4x1xf32>
    %5 = vector.broadcast %4 : vector<4x1xf32> to vector<4x256xf32>
    %6 = arith.addf %3, %5 : vector<4x256xf32>
    %cst_6 = arith.constant 0.000000e+00 : f32
    %7 = vector.broadcast %cst_6 : f32 to vector<4x256xf32>
    %8 = arith.maximumf %6, %7 : vector<4x256xf32>
    %c0_7 = arith.constant 0 : index
    %c0_8 = arith.constant 0 : index
    %9 = vector.load %arg5[%c0_7, %c0_8] : memref<32x4xf32, #tpu.memory_space<vmem>>, vector<32x4xf32>
    %cst_9 = arith.constant dense<0.000000e+00> : vector<32x256xf32>
    %10 = tpu.matmul %9, %8, %cst_9 {dimension_numbers = #tpu.dot_dimension_numbers<[1], [0], [0], [1], [0, 0, 1, 1], [], []>} : vector<32x4xf32>, vector<4x256xf32>, vector<32x256xf32> -> vector<32x256xf32>
    %c0_10 = arith.constant 0 : index
    %c0_11 = arith.constant 0 : index
    %11 = vector.load %arg6[%c0_10, %c0_11] : memref<32x1xf32, #tpu.memory_space<vmem>>, vector<32x1xf32>
    %12 = vector.broadcast %11 : vector<32x1xf32> to vector<32x256xf32>
    %13 = arith.addf %10, %12 : vector<32x256xf32>
    %cst_12 = arith.constant 5.000000e-01 : f32
    %14 = vector.broadcast %cst_12 : f32 to vector<32x256xf32>
    %15 = arith.mulf %14, %13 : vector<32x256xf32>
    %16 = math.tanh %15 : vector<32x256xf32>
    %cst_13 = arith.constant 1.000000e+00 : f32
    %17 = vector.broadcast %cst_13 : f32 to vector<32x256xf32>
    %18 = arith.addf %16, %17 : vector<32x256xf32>
    %cst_14 = arith.constant 5.000000e-01 : f32
    %19 = vector.broadcast %cst_14 : f32 to vector<32x256xf32>
    %20 = arith.mulf %19, %18 : vector<32x256xf32>
    %21 = arith.mulf %1, %20 : vector<32x256xf32>
    %c0_15 = arith.constant 0 : index
    %c0_16 = arith.constant 0 : index
    %c0_17 = arith.constant 0 : index
    %22 = vector.load %arg7[%c0_15, %c0_16, %c0_17] : memref<1x32x256xf32, #tpu.memory_space<vmem>>, vector<1x32x256xf32>
    %23 = vector.shape_cast %22 : vector<1x32x256xf32> to vector<32x256xf32>
    %24 = vector.shape_cast %21 : vector<32x256xf32> to vector<1x32x256xf32>
    tpu.vector_store %arg7[%c0_15, %c0_16, %c0_17], %24 {strides = array<i32>} : memref<1x32x256xf32, #tpu.memory_space<vmem>>, vector<1x32x256xf32>,
    return
  }
  func.func @transform_0(%arg0: i32, %arg1: i32) -> (i32, i32, i32) {
    %c0_i32 = arith.constant 0 : i32
    %c0_i32_0 = arith.constant 0 : i32
    return %arg0, %c0_i32, %arg1 : i32, i32, i32
  }
  func.func @transform_1(%arg0: i32, %arg1: i32) -> (i32, i32) {
    %c0_i32 = arith.constant 0 : i32
    %c0_i32_0 = arith.constant 0 : i32
    %c0_i32_1 = arith.constant 0 : i32
    return %c0_i32, %c0_i32_0 : i32, i32
  }
  func.func @transform_2(%arg0: i32, %arg1: i32) -> (i32, i32) {
    %c0_i32 = arith.constant 0 : i32
    %c0_i32_0 = arith.constant 0 : i32
    %c0_i32_1 = arith.constant 0 : i32
    return %c0_i32, %c0_i32_0 : i32, i32
  }
  func.func @transform_3(%arg0: i32, %arg1: i32) -> (i32, i32) {
    %c0_i32 = arith.constant 0 : i32
    %c0_i32_0 = arith.constant 0 : i32
    %c0_i32_1 = arith.constant 0 : i32
    return %c0_i32, %c0_i32_0 : i32, i32
  }
  func.func @transform_4(%arg0: i32, %arg1: i32) -> (i32, i32) {
    %c0_i32 = arith.constant 0 : i32
    %c0_i32_0 = arith.constant 0 : i32
    %c0_i32_1 = arith.constant 0 : i32
    return %c0_i32, %c0_i32_0 : i32, i32
  }
  func.func @transform_5(%arg0: i32, %arg1: i32) -> (i32, i32, i32) {
    %c0_i32 = arith.constant 0 : i32
    %c0_i32_0 = arith.constant 0 : i32
    return %arg0, %c0_i32, %arg1 : i32, i32, i32
  }
}

</mosaic_0001>

<llo_original>
// kernel: tpu_custom_call.1
$region0: #{tpu_custom_call.1}
  #allocation0 [shape = 'u32[]', space=smem, size = 0x4, offset = 0x4, fixed_abs, tag = 'smem constant byte address 0x4 - core index']
  #allocation1 [shape = 'u32[72,128]{1,0:T(1,128)}', space=vmem, size = 0x9000, scoped, tag = 'internal scratch']
  %s0 = inlined_call_operand.hbm [shape: f32[2,32,256], index: 0, kind: input, shape index: {}]
  %s1 = inlined_call_operand.vmem [shape: f32[4,32], index: 1, kind: input, shape index: {}]
  %s2 = inlined_call_operand.vmem [shape: f32[4,1], index: 2, kind: input, shape index: {}]
  %s3 = inlined_call_operand.vmem [shape: f32[32,4], index: 3, kind: input, shape index: {}]
  %s4 = inlined_call_operand.vmem [shape: f32[32,1], index: 4, kind: input, shape index: {}]
  %s5 = inlined_call_operand.hbm [shape: f32[2,32,256], index: 5, kind: output, shape index: {}]
  %s6 = sld [smem:[#allocation0]]
  $region57: #{tpu_custom_call.1} parent=0
    _
  %s8 = ssub.s32 1, %s6
  %s9 = scalar_select 0, %s8, %s6
  $region1: #{tpu_custom_call.1} parent=0
    #allocation2 [shape = 'u8[65536]{0}', space=vmem, size = 0x10000, scoped, tag = 'input window, operand 0']
    #allocation3 [shape = 's32[2]{0}', space=sflag, size = 0x8, scoped, tag = 'scoped memory for tpu_custom_call.1']
    #allocation4 [shape = 's32[2]{0}', space=sflag, size = 0x8, scoped, tag = 'scoped memory for tpu_custom_call.1']
    #allocation5 [shape = 'u8[65536]{0}', space=vmem, size = 0x10000, scoped, tag = 'output window, operand 0']
    %10 = vsyncpa [#allocation3], 0
    %s11 = scalar_lea.sflag [#allocation3], 1
    %12 = vsyncpa %s11, 0
    %13 = vsyncpa [#allocation4], 0
    %s14 = scalar_lea.sflag [#allocation4], 1
    %15 = vsyncpa %s14, 0
    loop: start=0, step=1, limit=4
    $region2: #{tpu_custom_call.1} parent=1 // loop_pre_header
      _
    $region3: #{tpu_custom_call.1} parent=1 // loop_header
      %s17 = sphi 0, %s21
      %p18 = scmp.ge.s32.totalorder %s17, 4
      %s24 = sphi 0, %s36
      %s25 = sphi 0, %s32
      %s26 = sphi 0, %s24
      %s27 = sphi 0, %s25
      %s28 = sphi 0, %s26
      %s29 = sphi 0, %s27
      %s41 = sphi 0, %s43
      %s44 = sphi 0, %s41
      %s45 = sphi 0, %s44
      %s61 = sphi 0, %s45
      %s65 = sphi 0, %s65
      %s67 = sphi 0, %s65
      %s68 = sphi 0, %s67
      %s82 = sphi 0, %s68
      %s86 = sphi 0, %s86
      %s88 = sphi 0, %s86
      %s89 = sphi 0, %s88
      %s103 = sphi 0, %s89
      %s107 = sphi 0, %s107
      %s109 = sphi 0, %s107
      %s110 = sphi 0, %s109
      %s124 = sphi 0, %s110
      %s128 = sphi 0, %s128
      %s130 = sphi 0, %s128
      %s131 = sphi 0, %s130
      %s145 = sphi 0, %s131
      %s153 = sphi 0, %s155
      %s156 = sphi 0, %s153
      %s157 = sphi 0, %s156
      %s173 = sphi 0, %s157
    $region4: #{tpu_custom_call.1} parent=1 // loop_header_branch
      %20 = sbr.rel (%p18) target = $region8
    $region5: #{tpu_custom_call.1} parent=1 // loop_body
      %s22 = ssub.s32 %s17, 1
      %s23 = ssub.s32 %s17, 2
      %s30 = sadd.s32 1, %s25
      %p31 = scmp.ge.s32.totalorder %s30, 1
      %s32 = scalar_select %p31, 0, %s30
      %s33 = sadd.s32 1, %s24
      %s34 = scalar_select %p31, %s33, %s24
      %p35 = scmp.ge.s32.totalorder %s34, 2
      %s36 = scalar_select %p35, 0, %s34
      %s37 = ssub.s32 %s24, %s36
      %s38 = ssub.s32 %s25, %s32
      %s39 = sor.u32 %s37, %s38
      %p40 = scmp.eq.s32.totalorder %s39, 0
      %s42 = sadd.s32 %s41, 1
      %s43 = scalar_select %p40, %s41, %s42
      %p46 = pneg %p40
      %p47 = scmp.eq.s32.totalorder %s17, 1
      %p48 = por %p46, %p47
      %p49 = scmp.ne.s32.totalorder %s41, %s44
      %p50 = scmp.eq.s32.totalorder %s17, 0
      %p51 = por %p49, %p50
      %p52 = scmp.ne.s32.totalorder %s41, %s44
      %p53 = scmp.eq.s32.totalorder %s22, 1
      %p54 = por %p52, %p53
      %p55 = scmp.ne.s32.totalorder %s44, %s45
      %p56 = scmp.eq.s32.totalorder %s22, 0
      %p57 = por %p55, %p56
      %p58 = scmp.ne.s32.totalorder %s44, %s45
      %p59 = scmp.eq.s32.totalorder %s23, 1
      %p60 = por %p58, %p59
      %p62 = scmp.ne.s32.totalorder %s45, %s61
      %p63 = scmp.eq.s32.totalorder %s23, 0
      %p64 = por %p62, %p63
      %s66 = sadd.s32 %s65, 1
      %p69 = scmp.eq.s32.totalorder %s17, 1
      %p70 = scmp.ne.s32.totalorder %s65, %s67
      %p71 = scmp.eq.s32.totalorder %s17, 0
      %p72 = por %p70, %p71
      %p73 = scmp.ne.s32.totalorder %s65, %s67
      %p74 = scmp.eq.s32.totalorder %s22, 1
      %p75 = por %p73, %p74
      %p76 = scmp.ne.s32.totalorder %s67, %s68
      %p77 = scmp.eq.s32.totalorder %s22, 0
      %p78 = por %p76, %p77
      %p79 = scmp.ne.s32.totalorder %s67, %s68
      %p80 = scmp.eq.s32.totalorder %s23, 1
      %p81 = por %p79, %p80
      %p83 = scmp.ne.s32.totalorder %s68, %s82
      %p84 = scmp.eq.s32.totalorder %s23, 0
      %p85 = por %p83, %p84
      %s87 = sadd.s32 %s86, 1
      %p90 = scmp.eq.s32.totalorder %s17, 1
      %p91 = scmp.ne.s32.totalorder %s86, %s88
      %p92 = scmp.eq.s32.totalorder %s17, 0
      %p93 = por %p91, %p92
      %p94 = scmp.ne.s32.totalorder %s86, %s88
      %p95 = scmp.eq.s32.totalorder %s22, 1
      %p96 = por %p94, %p95
      %p97 = scmp.ne.s32.totalorder %s88, %s89
      %p98 = scmp.eq.s32.totalorder %s22, 0
      %p99 = por %p97, %p98
      %p100 = scmp.ne.s32.totalorder %s88, %s89
      %p101 = scmp.eq.s32.totalorder %s23, 1
      %p102 = por %p100, %p101
      %p104 = scmp.ne.s32.totalorder %s89, %s103
      %p105 = scmp.eq.s32.totalorder %s23, 0
      %p106 = por %p104, %p105
      %s108 = sadd.s32 %s107, 1
      %p111 = scmp.eq.s32.totalorder %s17, 1
      %p112 = scmp.ne.s32.totalorder %s107, %s109
      %p113 = scmp.eq.s32.totalorder %s17, 0
      %p114 = por %p112, %p113
      %p115 = scmp.ne.s32.totalorder %s107, %s109
      %p116 = scmp.eq.s32.totalorder %s22, 1
      %p117 = por %p115, %p116
      %p118 = scmp.ne.s32.totalorder %s109, %s110
      %p119 = scmp.eq.s32.totalorder %s22, 0
      %p120 = por %p118, %p119
      %p121 = scmp.ne.s32.totalorder %s109, %s110
      %p122 = scmp.eq.s32.totalorder %s23, 1
      %p123 = por %p121, %p122
      %p125 = scmp.ne.s32.totalorder %s110, %s124
      %p126 = scmp.eq.s32.totalorder %s23, 0
      %p127 = por %p125, %p126
      %s129 = sadd.s32 %s128, 1
      %p132 = scmp.eq.s32.totalorder %s17, 1
      %p133 = scmp.ne.s32.totalorder %s128, %s130
      %p134 = scmp.eq.s32.totalorder %s17, 0
      %p135 = por %p133, %p134
      %p136 = scmp.ne.s32.totalorder %s128, %s130
      %p137 = scmp.eq.s32.totalorder %s22, 1
      %p138 = por %p136, %p137
      %p139 = scmp.ne.s32.totalorder %s130, %s131
      %p140 = scmp.eq.s32.totalorder %s22, 0
      %p141 = por %p139, %p140
      %p142 = scmp.ne.s32.totalorder %s130, %s131
      %p143 = scmp.eq.s32.totalorder %s23, 1
      %p144 = por %p142, %p143
      %p146 = scmp.ne.s32.totalorder %s131, %s145
      %p147 = scmp.eq.s32.totalorder %s23, 0
      %p148 = por %p146, %p147
      %s149 = ssub.s32 %s24, %s36
      %s150 = ssub.s32 %s25, %s32
      %s151 = sor.u32 %s149, %s150
      %p152 = scmp.eq.s32.totalorder %s151, 0
      %s154 = sadd.s32 %s153, 1
      %s155 = scalar_select %p152, %s153, %s154
      %p158 = pneg %p152
      %p159 = scmp.eq.s32.totalorder %s17, 1
      %p160 = por %p158, %p159
      %p161 = scmp.ne.s32.totalorder %s153, %s156
      %p162 = scmp.eq.s32.totalorder %s17, 0
      %p163 = por %p161, %p162
      %p164 = scmp.ne.s32.totalorder %s153, %s156
      %p165 = scmp.eq.s32.totalorder %s22, 1
      %p166 = por %p164, %p165
      %p167 = scmp.ne.s32.totalorder %s156, %s157
      %p168 = scmp.eq.s32.totalorder %s22, 0
      %p169 = por %p167, %p168
      %p170 = scmp.ne.s32.totalorder %s156, %s157
      %p171 = scmp.eq.s32.totalorder %s23, 1
      %p172 = por %p170, %p171
      %p174 = scmp.ne.s32.totalorder %s157, %s173
      %p175 = scmp.eq.s32.totalorder %s23, 0
      %p176 = por %p174, %p175
      %p177 = scmp.le.s32.totalorder 1, %s17
      %p178 = scmp.lt.s32.totalorder %s17, 3
      %p179 = pnand %p177, %p178
      %p180 = pneg %p179
      // Predicated region
      $region9: #{tpu_custom_call.1} parent=5 // pred_check
        _
      $region10: #{tpu_custom_call.1} parent=5 // pred_check_branch
        %182 = sbr.rel (%p179) target = $region12
      $region11: #{tpu_custom_call.1} parent=5 // pred_region
        %s183 = ssub.s32 %s17, 1
        // Predicated region
        $region13: #{tpu_custom_call.1} parent=11 // pred_check
          %p184 = pneg %p78
        $region14: #{tpu_custom_call.1} parent=11 // pred_check_branch
          %186 = sbr.rel (%p184) target = $region16
        $region15: #{tpu_custom_call.1} parent=11 // pred_region
          _
        $region16: #{tpu_custom_call.1} parent=11 // pred_fallthru
          _
        // Predicated region
        $region17: #{tpu_custom_call.1} parent=11 // pred_check
          %p187 = pneg %p99
        $region18: #{tpu_custom_call.1} parent=11 // pred_check_branch
          %189 = sbr.rel (%p187) target = $region20
        $region19: #{tpu_custom_call.1} parent=11 // pred_region
          _
        $region20: #{tpu_custom_call.1} parent=11 // pred_fallthru
          _
        // Predicated region
        $region21: #{tpu_custom_call.1} parent=11 // pred_check
          %p190 = pneg %p120
        $region22: #{tpu_custom_call.1} parent=11 // pred_check_branch
          %192 = sbr.rel (%p190) target = $region24
        $region23: #{tpu_custom_call.1} parent=11 // pred_region
          _
        $region24: #{tpu_custom_call.1} parent=11 // pred_fallthru
          _
        // Predicated region
        $region25: #{tpu_custom_call.1} parent=11 // pred_check
          %p193 = pneg %p141
        $region26: #{tpu_custom_call.1} parent=11 // pred_check_branch
          %195 = sbr.rel (%p193) target = $region28
        $region27: #{tpu_custom_call.1} parent=11 // pred_region
          _
        $region28: #{tpu_custom_call.1} parent=11 // pred_fallthru
          _
      $region12: #{tpu_custom_call.1} parent=5 // pred_fallthru
        _
      %p196 = scmp.lt.s32.totalorder %s17, 2
      // Predicated region
      $region29: #{tpu_custom_call.1} parent=5 // pred_check
        %p197 = pneg %p196
      $region30: #{tpu_custom_call.1} parent=5 // pred_check_branch
        %199 = sbr.rel (%p197) target = $region32
      $region31: #{tpu_custom_call.1} parent=5 // pred_region
        // Predicated region
        $region33: #{tpu_custom_call.1} parent=31 // pred_check
          %p200 = pneg %p51
        $region34: #{tpu_custom_call.1} parent=31 // pred_check_branch
          %202 = sbr.rel (%p200) target = $region36
        $region35: #{tpu_custom_call.1} parent=31 // pred_region
          %s203 = sand.u32 %s41, 1
          %s204 = scalar_lea.sflag [#allocation3], %s203
          %s205 = sand.u32 %s41, 1
          %s206 = smul.addr %s205, 64
          %s207 = scalar_lea.vmem [#allocation2], %s206
          %s208 = smul.u32 2, %s25
          %210 = vsyncadd %s204, 0
          %s211 = smul.addr %s24, 8
          %s212 = sadd.s32 %s208, %s211
          %s213 = smul.addr %s212, 8
          %s214 = scalar_lea.hbm %s0, %s213
          %s215 = sshll.u32 %s214, 4
          %s216 = int_to_ptr.hbm [resolvable:$true] %s215
          %s217 = sshll.u32 %s207, 4
          %s218 = int_to_ptr.vmem [resolvable:$true] %s217
          %223 = dma.hbm_to_vmem [thread:$0]  %s216, 1024, %s218, %s204, 256, 256, 16
        $region36: #{tpu_custom_call.1} parent=31 // pred_fallthru
          _
      $region32: #{tpu_custom_call.1} parent=5 // pred_fallthru
        _
      %p224 = scmp.le.s32.totalorder 1, %s17
      %p225 = scmp.lt.s32.totalorder %s17, 3
      %p226 = pnand %p224, %p225
      %p227 = pneg %p226
      // Predicated region
      $region37: #{tpu_custom_call.1} parent=5 // pred_check
        _
      $region38: #{tpu_custom_call.1} parent=5 // pred_check_branch
        %229 = sbr.rel (%p226) target = $region40
      $region39: #{tpu_custom_call.1} parent=5 // pred_region
        %s230 = ssub.s32 %s17, 1
        %s231 = sand.u32 %s44, 1
        %s232 = scalar_lea.sflag [#allocation3], %s231
        %s233 = sand.u32 %s44, 1
        %s234 = smul.addr %s233, 64
        %s235 = scalar_lea.vmem [#allocation2], %s234
        // Predicated region
        $region41: #{tpu_custom_call.1} parent=39 // pred_check
          %p236 = pneg %p57
        $region42: #{tpu_custom_call.1} parent=39 // pred_check_branch
          %238 = sbr.rel (%p236) target = $region44
        $region43: #{tpu_custom_call.1} parent=39 // pred_region
          %240 = dma.done %s232, 1024
        $region44: #{tpu_custom_call.1} parent=39 // pred_fallthru
          _
        %s241 = sand.u32 %s44, 1
        %s242 = scalar_lea.sflag [#allocation3], %s241
        %s243 = sand.u32 %s44, 1
        %s244 = smul.addr %s243, 64
        %s245 = scalar_lea.vmem [#allocation2], %s244
        %p246 = pneg %p57
        %p247 = pneg %p54
        %p248 = pneg %p78
        %p249 = pneg %p75
        %p250 = pneg %p99
        %p251 = pneg %p96
        %p252 = pneg %p120
        %p253 = pneg %p117
        %p254 = pneg %p141
        %p255 = pneg %p138
        %p256 = pneg %p169
        %p257 = pneg %p166
        %s258 = sand.u32 %s156, 1
        %s259 = scalar_lea.sflag [#allocation4], %s258
        %s260 = sand.u32 %s156, 1
        %s261 = smul.addr %s260, 64
        %s262 = scalar_lea.vmem [#allocation5], %s261
        %s263 = smul.u32 2, %s27
        %s264 = smul.u32 2, %s27
        %v265 = vld [vmem:[%s235] sm:$0xff]
        %v266 = vld [vmem:[%s235 + $0x8] sm:$0xff]
        %v267 = vld [vmem:[%s235 + $0x10] sm:$0xff]
        %v268 = vld [vmem:[%s235 + $0x18] sm:$0xff]
        %v269 = vld [vmem:[%s235 + $0x20] sm:$0xff]
        %v270 = vld [vmem:[%s235 + $0x28] sm:$0xff]
        %v271 = vld [vmem:[%s235 + $0x30] sm:$0xff]
        %v272 = vld [vmem:[%s235 + $0x38] sm:$0xff]
        %v273 = vld [vmem:[%s1] sm:$0xf]
        %v274 = vld [vmem:[%s2] sm:$0xf]
        %276 = vset.pattern.permute.xlu0 0
        %277 = vperm.xlu0 %276, %v274
        %v278 = vpop.permute.xlu0 %277
        %vm280 = vcmask 261120
        %v282 = vsel %vm280, %v273, 0
        %284 = vmatpush.msra.mxu0 0.0
        %285 = vmatpush.msra.mxu0 0.0
        %286 = vmatpush.msra.mxu0 0.0
        %287 = vmatpush.msra.mxu0 0.0
        %288 = vmatpush.msra.mxu0 0.0
        %289 = vmatpush.msra.mxu0 0.0
        %290 = vmatpush.msra.mxu0 0.0
        %291 = vmatpush.msra.mxu0 0.0
        %292 = vmatpush.msra.mxu0 0.0
        %293 = vmatpush.msra.mxu0 0.0
        %294 = vmatpush.msra.mxu0 0.0
        %295 = vmatpush.msra.mxu0 0.0
        %296 = vmatpush.msra.mxu0 %v271
        %297 = vmatpush.msra.mxu0 %v269
        %298 = vmatpush.msra.mxu0 %v267
        %299 = vmatpush.msra.mxu0 %v265
        %300 = vmatmul.f32.gmra.mxu0 %v282
        %v301 = vpop.f32.mrf.mxu0
        %v302 = vadd.f32 %v278, %v301
        %303 = vdwg.mxu0
        %304 = vmatpush.msra.mxu0 0.0
        %305 = vmatpush.msra.mxu0 0.0
        %306 = vmatpush.msra.mxu0 0.0
        %307 = vmatpush.msra.mxu0 0.0
        %308 = vmatpush.msra.mxu0 0.0
        %309 = vmatpush.msra.mxu0 0.0
        %310 = vmatpush.msra.mxu0 0.0
        %311 = vmatpush.msra.mxu0 0.0
        %312 = vmatpush.msra.mxu0 0.0
        %313 = vmatpush.msra.mxu0 0.0
        %314 = vmatpush.msra.mxu0 0.0
        %315 = vmatpush.msra.mxu0 0.0
        %316 = vmatpush.msra.mxu0 %v272
        %317 = vmatpush.msra.mxu0 %v270
        %318 = vmatpush.msra.mxu0 %v268
        %319 = vmatpush.msra.mxu0 %v266
        %320 = vmatmul.f32.gmra.mxu0 %v282
        %v321 = vpop.f32.mrf.mxu0
        %v322 = vadd.f32 %v278, %v321
        %323 = vdwg.mxu0
        %v324 = vmax.f32 %v302, 0.0
        %v325 = vmax.f32 %v322, 0.0
        %v326 = vld [vmem:[%s3] sm:$0xff]
        %v327 = vld [vmem:[%s3 + $0x8] sm:$0xff]
        %v328 = vld [vmem:[%s3 + $0x10] sm:$0xff]
        %v329 = vld [vmem:[%s3 + $0x18] sm:$0xff]
        %v330 = vld [vmem:[%s4] sm:$0xff]
        %v331 = vld [vmem:[%s4 + $0x8] sm:$0xff]
        %v332 = vld [vmem:[%s4 + $0x10] sm:$0xff]
        %v333 = vld [vmem:[%s4 + $0x18] sm:$0xff]
        %335 = vset.pattern.permute.xlu0 0
        %336 = vperm.xlu0 %335, %v330
        %v337 = vpop.permute.xlu0 %336
        %340 = vset.pattern.permute.xlu0 0
        %341 = vperm.xlu0 %340, %v331
        %v342 = vpop.permute.xlu0 %341
        %345 = vset.pattern.permute.xlu0 0
        %346 = vperm.xlu0 %345, %v332
        %v347 = vpop.permute.xlu0 %346
        %350 = vset.pattern.permute.xlu0 0
        %351 = vperm.xlu0 %350, %v333
        %v352 = vpop.permute.xlu0 %351
        %vm354 = vcmask 31744
        %v356 = vsel %vm354, %v326, 0
        %v359 = vsel %vm354, %v327, 0
        %v362 = vsel %vm354, %v328, 0
        %v365 = vsel %vm354, %v329, 0
        %vm367 = vcmask 1043456
        %v369 = vsel %vm367, %v324, 0
        %v372 = vsel %vm367, %v325, 0
        %374 = vmatpush.msra.mxu0 0.0
        %375 = vmatpush.msra.mxu0 0.0
        %376 = vmatpush.msra.mxu0 0.0
        %377 = vmatpush.msra.mxu0 0.0
        %378 = vmatpush.msra.mxu0 0.0
        %379 = vmatpush.msra.mxu0 0.0
        %380 = vmatpush.msra.mxu0 0.0
        %381 = vmatpush.msra.mxu0 0.0
        %382 = vmatpush.msra.mxu0 0.0
        %383 = vmatpush.msra.mxu0 0.0
        %384 = vmatpush.msra.mxu0 0.0
        %385 = vmatpush.msra.mxu0 0.0
        %386 = vmatpush.msra.mxu0 0.0
        %387 = vmatpush.msra.mxu0 0.0
        %388 = vmatpush.msra.mxu0 0.0
        %389 = vmatpush.msra.mxu0 %v369
        %390 = vmatmul.f32.gmra.mxu0 %v356
        %v391 = vpop.f32.mrf.mxu0
        %v392 = vadd.f32 %v337, %v391
        %393 = vmatmul.f32.gmra.mxu0 %v359
        %v394 = vpop.f32.mrf.mxu0
        %v395 = vadd.f32 %v342, %v394
        %396 = vmatmul.f32.gmra.mxu0 %v362
        %v397 = vpop.f32.mrf.mxu0
        %v398 = vadd.f32 %v347, %v397
        %399 = vmatmul.f32.gmra.mxu0 %v365
        %v400 = vpop.f32.mrf.mxu0
        %v401 = vadd.f32 %v352, %v400
        %402 = vdwg.mxu0
        %403 = vmatpush.msra.mxu0 0.0
        %404 = vmatpush.msra.mxu0 0.0
        %405 = vmatpush.msra.mxu0 0.0
        %406 = vmatpush.msra.mxu0 0.0
        %407 = vmatpush.msra.mxu0 0.0
        %408 = vmatpush.msra.mxu0 0.0
        %409 = vmatpush.msra.mxu0 0.0
        %410 = vmatpush.msra.mxu0 0.0
        %411 = vmatpush.msra.mxu0 0.0
        %412 = vmatpush.msra.mxu0 0.0
        %413 = vmatpush.msra.mxu0 0.0
        %414 = vmatpush.msra.mxu0 0.0
        %415 = vmatpush.msra.mxu0 0.0
        %416 = vmatpush.msra.mxu0 0.0
        %417 = vmatpush.msra.mxu0 0.0
        %418 = vmatpush.msra.mxu0 %v372
        %419 = vmatmul.f32.gmra.mxu0 %v356
        %v420 = vpop.f32.mrf.mxu0
        %v421 = vadd.f32 %v337, %v420
        %422 = vmatmul.f32.gmra.mxu0 %v359
        %v423 = vpop.f32.mrf.mxu0
        %v424 = vadd.f32 %v342, %v423
        %425 = vmatmul.f32.gmra.mxu0 %v362
        %v426 = vpop.f32.mrf.mxu0
        %v427 = vadd.f32 %v347, %v426
        %428 = vmatmul.f32.gmra.mxu0 %v365
        %v429 = vpop.f32.mrf.mxu0
        %v430 = vadd.f32 %v352, %v429
        %431 = vdwg.mxu0
        %v432 = vmul.f32 %v392, 0.5
        %v433 = vmul.f32 %v421, 0.5
        %v434 = vmul.f32 %v395, 0.5
        %v435 = vmul.f32 %v424, 0.5
        %v436 = vmul.f32 %v398, 0.5
        %v437 = vmul.f32 %v427, 0.5
        %v438 = vmul.f32 %v401, 0.5
        %v439 = vmul.f32 %v430, 0.5
        %v440 = vtanh.pop %v432
        %v441 = vtanh.pop %v433
        %v442 = vtanh.pop %v434
        %v443 = vtanh.pop %v435
        %v444 = vtanh.pop %v436
        %v445 = vtanh.pop %v437
        %v446 = vtanh.pop %v438
        %v447 = vtanh.pop %v439
        %v448 = vadd.f32 %v440, 1.0
        %v449 = vadd.f32 %v441, 1.0
        %v450 = vadd.f32 %v442, 1.0
        %v451 = vadd.f32 %v443, 1.0
        %v452 = vadd.f32 %v444, 1.0
        %v453 = vadd.f32 %v445, 1.0
        %v454 = vadd.f32 %v446, 1.0
        %v455 = vadd.f32 %v447, 1.0
        %v456 = vmul.f32 %v448, 0.5
        %v457 = vmul.f32 %v449, 0.5
        %v458 = vmul.f32 %v450, 0.5
        %v459 = vmul.f32 %v451, 0.5
        %v460 = vmul.f32 %v452, 0.5
        %v461 = vmul.f32 %v453, 0.5
        %v462 = vmul.f32 %v454, 0.5
        %v463 = vmul.f32 %v455, 0.5
        %v464 = vmul.f32 %v265, %v456
        %v465 = vmul.f32 %v266, %v457
        %v466 = vmul.f32 %v267, %v458
        %v467 = vmul.f32 %v268, %v459
        %v468 = vmul.f32 %v269, %v460
        %v469 = vmul.f32 %v270, %v461
        %v470 = vmul.f32 %v271, %v462
        %v471 = vmul.f32 %v272, %v463
        %472 = vst [vmem:[%s262] sm:$0xff] %v464
        %473 = vst [vmem:[%s262 + $0x8] sm:$0xff] %v465
        %474 = vst [vmem:[%s262 + $0x10] sm:$0xff] %v466
        %475 = vst [vmem:[%s262 + $0x18] sm:$0xff] %v467
        %476 = vst [vmem:[%s262 + $0x20] sm:$0xff] %v468
        %477 = vst [vmem:[%s262 + $0x28] sm:$0xff] %v469
        %478 = vst [vmem:[%s262 + $0x30] sm:$0xff] %v470
        %479 = vst [vmem:[%s262 + $0x38] sm:$0xff] %v471
        %s480 = sand.u32 %s156, 1
        %s481 = scalar_lea.sflag [#allocation4], %s480
        %s482 = sand.u32 %s156, 1
        %s483 = smul.addr %s482, 64
        %s484 = scalar_lea.vmem [#allocation5], %s483
        // Predicated region
        $region45: #{tpu_custom_call.1} parent=39 // pred_check
          %p485 = pneg %p166
        $region46: #{tpu_custom_call.1} parent=39 // pred_check_branch
          %487 = sbr.rel (%p485) target = $region48
        $region47: #{tpu_custom_call.1} parent=39 // pred_region
          %s488 = smul.u32 2, %s27
          %490 = vsyncadd %s481, 0
          %s491 = smul.addr %s26, 8
          %s492 = sadd.s32 %s488, %s491
          %s493 = smul.addr %s492, 8
          %s494 = scalar_lea.hbm %s5, %s493
          %s495 = sshll.u32 %s484, 4
          %s496 = int_to_ptr.vmem [resolvable:$true] %s495
          %s497 = sshll.u32 %s494, 4
          %s498 = int_to_ptr.hbm [resolvable:$true] %s497
          %503 = dma.vmem_to_hbm [thread:$0]  %s496, 1024, %s498, %s481, 256, 256, 16
        $region48: #{tpu_custom_call.1} parent=39 // pred_fallthru
          _
      $region40: #{tpu_custom_call.1} parent=5 // pred_fallthru
        _
      %p504 = scmp.le.s32.totalorder 2, %s17
      // Predicated region
      $region49: #{tpu_custom_call.1} parent=5 // pred_check
        %p505 = pneg %p504
      $region50: #{tpu_custom_call.1} parent=5 // pred_check_branch
        %507 = sbr.rel (%p505) target = $region52
      $region51: #{tpu_custom_call.1} parent=5 // pred_region
        %s508 = ssub.s32 %s17, 2
        // Predicated region
        $region53: #{tpu_custom_call.1} parent=51 // pred_check
          %p509 = pneg %p172
        $region54: #{tpu_custom_call.1} parent=51 // pred_check_branch
          %511 = sbr.rel (%p509) target = $region56
        $region55: #{tpu_custom_call.1} parent=51 // pred_region
          %s512 = sand.u32 %s157, 1
          %s513 = scalar_lea.sflag [#allocation4], %s512
          %s514 = sand.u32 %s157, 1
          %s515 = smul.addr %s514, 64
          %s516 = scalar_lea.vmem [#allocation5], %s515
          %518 = dma.done %s513, 1024
        $region56: #{tpu_custom_call.1} parent=51 // pred_fallthru
          _
      $region52: #{tpu_custom_call.1} parent=5 // pred_fallthru
        _
    $region6: #{tpu_custom_call.1} parent=1 // loop_footer
      %s21 = sadd.s32 1, %s17
    $region7: #{tpu_custom_call.1} parent=1 // loop_footer_branch
      %16 = sbr.rel target = $region3
    $region8: #{tpu_custom_call.1} parent=1 // loop_exit
      _
    %519 = vsyncpa [#allocation3], 1
    %s520 = scalar_lea.sflag [#allocation3], 1
    %521 = vsyncpa %s520, 1
    %522 = vsyncpa [#allocation4], 1
    %s523 = scalar_lea.sflag [#allocation4], 1
    %524 = vsyncpa %s523, 1

</llo_original>
